<compile_context>
chip_gen: v5e
topology: v5e:2x2
jax: 0.10.0
libtpu: 0.0.40
codegen_flags: <defaults>
</compile_context>

<pallas_src>
import functools
import math

import jax
import jax.numpy as jnp
from jax import lax
from jax.experimental import pallas as pl
from jax.experimental.pallas import tpu as pltpu

_HALO = 128   # lane-aligned halo appended to each input time tile (needs HALO >= Q-1)


def _round_up(x, m):
    return -(-x // m) * m


def _vmem_budget_bytes():
    """~75% of physical VMEM (≈48 MiB on v7x, ≈96 MiB on v5e/v6e)."""
    try:
        cap = int(pltpu.get_tpu_info().vmem_capacity_bytes)
    except Exception:
        cap = 128 * 2**20
    return max(16 * 2**20, int(0.75 * cap))


# ----------------------------- Pallas kernels ------------------------------

def _conv_stats_kernel(x_ref, xh_ref, w_ref, b_ref, a_ref, stat_ref, *,
                       tl, q_taps, lout, use_slab):
    """Strided conv (stride folded via polyphase) + bias + accumulated VBN stats.

    x_ref   : (1, Cg, TL)      current polyphase input tile        (mxu dtype)
    xh_ref  : (1, Cg, HALO)    next-HALO-columns halo tile         (mxu dtype)
    w_ref   : (Cout, Q*Cg)     flattened weight   [use_slab=True]
              (Q, Cout, Cg)    per-tap weight     [use_slab=False]
    b_ref   : (Cout, 1)        bias (f32)
    a_ref   : (1, Cout, TL)    pre-norm conv output tile (a_dtype)
    stat_ref: (1, Cout, 2)     [sum(a), sum(a*a)] accumulated over the t axis (f32)
    """
    t = pl.program_id(1)

    window = jnp.concatenate([x_ref[0], xh_ref[0]], axis=-1)      # (Cg, TL + HALO)

    if use_slab:
        # im2col of the small window: Q shifted views stacked -> one MXU push.
        parts = [window[:, q:q + tl] for q in range(q_taps)]
        slab = parts[0] if q_taps == 1 else jnp.concatenate(parts, axis=0)
        a = jnp.dot(w_ref[...], slab, preferred_element_type=jnp.float32)
    else:
        # Q accumulated dots: no (Q*Cg, TL) slab materialization; MXU accumulates
        # in f32 for free once Cg >= 128 (review: v5e single vst slot / vreg spills).
        a = jnp.dot(w_ref[0], window[:, :tl], preferred_element_type=jnp.float32)
        for q in range(1, q_taps):
            a += jnp.dot(w_ref[q], window[:, q:q + tl],
                         preferred_element_type=jnp.float32)
    a = a + b_ref[...]
    a_ref[0] = a.astype(a_ref.dtype)

    # VirtualBatchNorm partial statistics, accumulated in the VMEM-resident output
    # block across the innermost ("arbitrary") t axis; masked on the ragged last tile.
    @pl.when(t == 0)
    def _():
        stat_ref[...] = jnp.zeros_like(stat_ref)

    lane = lax.broadcasted_iota(jnp.int32, (1, tl), 1)
    am = jnp.where(t * tl + lane < lout, a, 0.0)
    stat_ref[0] += jnp.concatenate(
        [jnp.sum(am, axis=-1, keepdims=True),
         jnp.sum(am * am, axis=-1, keepdims=True)], axis=1)


def _make_vbn_prelu_kernel(ret_linear):
    """Fused (a*scale + shift) virtual-batch-norm + PReLU elementwise kernel.

    p_ref packs [scale, shift, alpha] as a single (Cout, 3) resident input.
    """
    def kernel(a_ref, p_ref, *o_refs):
        y = a_ref[0].astype(jnp.float32) * p_ref[:, 0:1] + p_ref[:, 1:2]
        h = jnp.where(y > 0.0, y, p_ref[:, 2:3] * y)
        o_refs[0][0] = h.astype(o_refs[0].dtype)
        if ret_linear:
            o_refs[1][0] = y.astype(o_refs[1].dtype)
    return kernel


# ------------------------- parameter construction --------------------------

def make_virtual_gconv1d(ninp, fmaps, kwidth, stride, key, eps=1e-5):
    kw, kb, kg = jax.random.split(key, 3)
    bound = 1.0 / math.sqrt(ninp * kwidth)             # torch Conv1d default init bound
    weight = jax.random.uniform(kw, (fmaps, ninp, kwidth), jnp.float32, -bound, bound)
    bias = jax.random.uniform(kb, (fmaps,), jnp.float32, -bound, bound)
    gamma = 0.9 + 0.02 * jax.random.normal(kg, (fmaps,), jnp.float32)   # N(1-0.1, 0.02)
    beta = jnp.zeros((fmaps,), jnp.float32)
    alpha = jnp.zeros((fmaps,), jnp.float32)           # nn.PReLU(fmaps, init=0)
    params = dict(weight=weight, bias=bias, gamma=gamma, beta=beta, alpha=alpha)
    cfg = dict(ninp=ninp, fmaps=fmaps, kwidth=kwidth, stride=stride,
               P=(kwidth // 2 - int(stride > 1), kwidth // 2), eps=eps)
    return params, cfg


# ------------------------------ Pallas forward ------------------------------

def virtual_gconv1d_forward(x, params, cfg, *, tl=1024, ret_linear=False,
                            a_dtype=jnp.float32, mxu_dtype=jnp.float32):
    N, Cin, _ = x.shape
    Cout, K, s, eps = cfg["fmaps"], cfg["kwidth"], cfg["stride"], cfg["eps"]
    P1, P2 = cfg["P"]
    assert Cin == cfg["ninp"]
    assert tl % 128 == 0, "output tile must be lane-dense (multiple of 128)"

    Q = -(-K // s)                       # taps after folding the stride
    Cg = s * Cin                         # channels after folding the stride
    assert Q - 1 <= _HALO, "kwidth too large for the fixed 128-lane halo"

    # --- reflect pad (one fused XLA pass over x) ---
    x_p = jnp.pad(x.astype(jnp.float32), ((0, 0), (0, 0), (P1, P2)), mode="reflect")
    L = x_p.shape[-1]
    Lout = (L - K) // s + 1

    use_slab = Cg < 128                  # fused im2col dot for small-channel layers
    isz_x = jnp.dtype(mxu_dtype).itemsize
    isz_a = jnp.dtype(a_dtype).itemsize
    budget = _vmem_budget_bytes()

    # --- conv tile: largest lane-dense tile that fits the VMEM budget (2x buffered) ---
    def conv_fp(t_):
        blocks = (2 * Cg * (t_ + _HALO) * isz_x        # x tile + halo
                  + 2 * Cout * Q * Cg * isz_x          # weight (resident)
                  + 2 * Cout * 4                       # bias
                  + 2 * Cout * t_ * isz_a              # a_raw tile
                  + 2 * Cout * 2 * 4)                  # stats accumulator
        interm = ((Q * Cg * t_ * isz_x) if use_slab else 0) \
                 + Cg * (t_ + _HALO) * isz_x + Cout * t_ * 4
        return blocks + interm

    tl_eff = min(tl, _round_up(Lout, 128))
    while tl_eff > 128 and 2 * conv_fp(tl_eff) + (4 << 20) > budget:
        tl_eff = max(128, ((tl_eff // 2) // 128) * 128)
    num_t = -(-Lout // tl_eff)
    vmem_conv = int(min(budget, max(16 << 20, 2 * conv_fp(tl_eff) + (8 << 20))))

    # --- polyphase restructure: strided conv -> stride-1 conv with Q taps ---
    # TODO(synk): fold reflect-pad + polyphase into the kernel via pl.ANY + manual DMA
    #             to remove this extra HBM pass over x_p.
    T_poly = num_t * tl_eff + _HALO
    pad_r = T_poly * s - L
    assert pad_r >= 0
    x_pp = jnp.pad(x_p, ((0, 0), (0, 0), (0, pad_r)))
    x_poly = (x_pp.reshape(N, Cin, T_poly, s)
                   .transpose(0, 3, 1, 2)
                   .reshape(N, Cg, T_poly)).astype(mxu_dtype)
    # x_poly[n, r*Cin+ci, u] = x_pp[n, ci, u*s+r]

    # --- fold (stride, K) taps into the weight ---
    w = params["weight"].astype(jnp.float32)
    w_pad = jnp.pad(w, ((0, 0), (0, 0), (0, Q * s - K)))
    w_flat = (w_pad.reshape(Cout, Cin, Q, s)
                    .transpose(0, 2, 3, 1)
                    .reshape(Cout, Q * Cg))            # column index = q*Cg + r*Cin + ci
    if use_slab:
        w_in = w_flat.astype(mxu_dtype)
        w_spec = pl.BlockSpec((Cout, Q * Cg), lambda n, t: (0, 0))
    else:
        w_in = w_flat.reshape(Cout, Q, Cg).transpose(1, 0, 2).astype(mxu_dtype)
        w_spec = pl.BlockSpec((Q, Cout, Cg), lambda n, t: (0, 0, 0))
    b2 = params["bias"].reshape(Cout, 1).astype(jnp.float32)

    # --- kernel 1: conv + bias + accumulated VBN statistics ---
    conv_kernel = functools.partial(_conv_stats_kernel, tl=tl_eff, q_taps=Q,
                                    lout=Lout, use_slab=use_slab)
    halo_step = tl_eff // _HALO
    a_raw, stats = pl.pallas_call(
        conv_kernel,
        out_shape=(jax.ShapeDtypeStruct((N, Cout, Lout), a_dtype),
                   jax.ShapeDtypeStruct((N, Cout, 2), jnp.float32)),
        grid_spec=pltpu.PrefetchScalarGridSpec(
            num_scalar_prefetch=0,
            grid=(N, num_t),
            in_specs=[
                pl.BlockSpec((1, Cg, tl_eff), lambda n, t: (n, 0, t)),
                pl.BlockSpec((1, Cg, _HALO),
                             lambda n, t: (n, 0, (t + 1) * halo_step)),
                w_spec,
                pl.BlockSpec((Cout, 1), lambda n, t: (0, 0)),
            ],
            out_specs=(
                pl.BlockSpec((1, Cout, tl_eff), lambda n, t: (n, 0, t)),
                pl.BlockSpec((1, Cout, 2), lambda n, t: (n, 0, 0)),
            )),
        compiler_params=pltpu.CompilerParams(
            dimension_semantics=("parallel", "arbitrary"),
            vmem_limit_bytes=vmem_conv),
    )(x_poly, x_poly, w_in, b2)

    # --- VirtualBatchNorm statistics (tiny (N, Cout, 2) host-side reduction) ---
    denom = float(N * Lout)
    sums = stats.sum(axis=0)                      # (Cout, 2)
    mean = sums[:, 0] / denom
    mean_sq = sums[:, 1] / denom
    new_c = 1.0 / (N + 1.0)                       # forward_head blend; ref stats == stats
    mean_h = new_c * mean + (1.0 - new_c) * mean
    mean_sq_h = new_c * mean_sq + (1.0 - new_c) * mean_sq
    std = jnp.sqrt(eps + mean_sq_h - mean_h * mean_h)
    scale = params["gamma"].astype(jnp.float32) / std
    shift = params["beta"].astype(jnp.float32) - mean_h * scale
    pp = jnp.stack([scale, shift, params["alpha"].astype(jnp.float32)], axis=1)  # (Cout,3)

    # --- kernel 2: fused normalize + PReLU with its own, larger lane-dense tile ---
    def ew_fp(t_):
        return (2 * Cout * t_ * isz_a + 2 * Cout * 3 * 4
                + 2 * Cout * t_ * 4 * (2 if ret_linear else 1)
                + Cout * t_ * 4)

    tl2 = min(_round_up(Lout, 128), max(4 * tl_eff, 2048))
    while tl2 > 128 and 2 * ew_fp(tl2) + (4 << 20) > budget:
        tl2 = max(128, ((tl2 // 2) // 128) * 128)
    num_t2 = -(-Lout // tl2)
    vmem_ew = int(min(budget, max(16 << 20, 2 * ew_fp(tl2) + (8 << 20))))

    out_shapes = [jax.ShapeDtypeStruct((N, Cout, Lout), jnp.float32)]
    out_specs = [pl.BlockSpec((1, Cout, tl2), lambda n, t: (n, 0, t))]
    if ret_linear:
        out_shapes.append(jax.ShapeDtypeStruct((N, Cout, Lout), jnp.float32))
        out_specs.append(pl.BlockSpec((1, Cout, tl2), lambda n, t: (n, 0, t)))

    outs = pl.pallas_call(
        _make_vbn_prelu_kernel(ret_linear),
        out_shape=tuple(out_shapes),
        grid_spec=pltpu.PrefetchScalarGridSpec(
            num_scalar_prefetch=0,
            grid=(N, num_t2),
            in_specs=[
                pl.BlockSpec((1, Cout, tl2), lambda n, t: (n, 0, t)),
                pl.BlockSpec((Cout, 3), lambda n, t: (0, 0)),
            ],
            out_specs=tuple(out_specs)),
        compiler_params=pltpu.CompilerParams(
            dimension_semantics=("parallel", "parallel"),
            vmem_limit_bytes=vmem_ew),
    )(a_raw, pp)

    if ret_linear:
        return outs[0], outs[1]
    return outs[0], None


# ------------------------- pure-JAX reference (lax) -------------------------

def ref_virtual_gconv1d_forward(x, params, cfg):
    """Mirror of VirtualGConv1DBlock.forward(ret_linear=True) in plain JAX."""
    s, eps = cfg["stride"], cfg["eps"]
    P1, P2 = cfg["P"]
    x_p = jnp.pad(x.astype(jnp.float32), ((0, 0), (0, 0), (P1, P2)), mode="reflect")
    a_raw = lax.conv_general_dilated(
        x_p, params["weight"].astype(jnp.float32),
        window_strides=(s,), padding=[(0, 0)],
        dimension_numbers=("NCH", "OIH", "NCH"),
        precision=lax.Precision.HIGHEST) + params["bias"].reshape(1, -1, 1)
    mean = a_raw.mean(axis=2, keepdims=True).mean(axis=0, keepdims=True)
    mean_sq = (a_raw ** 2).mean(axis=2, keepdims=True).mean(axis=0, keepdims=True)
    N = x.shape[0]
    new_c = 1.0 / (N + 1.0)
    m = new_c * mean + (1.0 - new_c) * mean
    msq = new_c * mean_sq + (1.0 - new_c) * mean_sq
    std = jnp.sqrt(eps + msq - m * m)
    gamma = params["gamma"].reshape(1, -1, 1)
    beta = params["beta"].reshape(1, -1, 1)
    a = (a_raw - m) / std * gamma + beta
    alpha = params["alpha"].reshape(1, -1, 1)
    h = jnp.where(a > 0.0, a, alpha * a)
    return h, a


# ----------------------------------- main -----------------------------------

if __name__ == "__main__":
    key = jax.random.PRNGKey(0)
    k_param, k_x, k2_param, k2_x = jax.random.split(key, 4)

    # Config 1: small-channel layer (Cg=8 < 128) -> fused im2col-slab single-dot path.
    NINP, FMAPS, KWIDTH, STRIDE = 4, 8, 5, 2
    BATCH, WIDTH = 2, 1024                 # padded L = 1027 -> Lout = 512
    params, cfg = make_virtual_gconv1d(NINP, FMAPS, KWIDTH, STRIDE, k_param)
    x = jax.random.normal(k_x, (BATCH, NINP, WIDTH), jnp.float32)

    h, a_lin = virtual_gconv1d_forward(x, params, cfg, ret_linear=True)
    h = jax.block_until_ready(h)
    a_lin = jax.block_until_ready(a_lin)

    h_ref, a_ref = ref_virtual_gconv1d_forward(x, params, cfg)
    h_ref = jax.block_until_ready(h_ref)
    assert h.shape == h_ref.shape, (h.shape, h_ref.shape)
    assert a_lin.shape == a_ref.shape, (a_lin.shape, a_ref.shape)
    assert jnp.allclose(h, h_ref, atol=2e-4, rtol=2e-4), \
        float(jnp.max(jnp.abs(h - h_ref)))
    assert jnp.allclose(a_lin, a_ref, atol=2e-4, rtol=2e-4), \
        float(jnp.max(jnp.abs(a_lin - a_ref)))

    # Same layer with bf16 MXU operands + bf16 a_raw HBM intermediate (v6e/v7x path);
    # stats/normalization still computed from the f32 accumulator.
    h16, _ = virtual_gconv1d_forward(x, params, cfg, ret_linear=False,
                                     a_dtype=jnp.bfloat16, mxu_dtype=jnp.bfloat16)
    h16 = jax.block_until_ready(h16)
    assert jnp.allclose(h16, h_ref, atol=6e-2, rtol=6e-2), \
        float(jnp.max(jnp.abs(h16 - h_ref)))

    # Config 2: channel-heavy layer (Cg = stride*Cin = 128) -> accumulated-dots path,
    # with a ragged last tile (Lout = 192 is not a multiple of 128).
    params2, cfg2 = make_virtual_gconv1d(64, 16, 5, 2, k2_param)
    x2 = jax.random.normal(k2_x, (2, 64, 384), jnp.float32)
    h2, a2 = virtual_gconv1d_forward(x2, params2, cfg2, ret_linear=True)
    h2 = jax.block_until_ready(h2)
    h2_ref, a2_ref = ref_virtual_gconv1d_forward(x2, params2, cfg2)
    assert h2.shape == h2_ref.shape, (h2.shape, h2_ref.shape)
    assert jnp.allclose(h2, h2_ref, atol=2e-3, rtol=2e-3), \
        float(jnp.max(jnp.abs(h2 - h2_ref)))
    assert jnp.allclose(a2, a2_ref, atol=2e-3, rtol=2e-3), \
        float(jnp.max(jnp.abs(a2 - a2_ref)))

    print("KERNEL_OK")
</pallas_src>

<mosaic_0001>
module attributes {stable_mosaic.version = 11 : i64} {
  func.func @_conv_stats_kernel(%arg0: i32, %arg1: i32, %arg2: memref<1x8x512xf32, #tpu.memory_space<vmem>>, %arg3: memref<1x8x128xf32, #tpu.memory_space<vmem>>, %arg4: memref<8x24xf32, #tpu.memory_space<vmem>>, %arg5: memref<8x1xf32, #tpu.memory_space<vmem>>, %arg6: memref<1x8x512xf32, #tpu.memory_space<vmem>>, %arg7: memref<1x8x2xf32, #tpu.memory_space<vmem>>) attributes {dimension_semantics = [#tpu.dimension_semantics<parallel>, #tpu.dimension_semantics<arbitrary>], iteration_bounds = array<i64: 2, 1>, scalar_prefetch = 0 : i64, scratch_operands = 0 : i64, tpu.core_type = #tpu.core_type<tc>, window_params = [{transform_indices = @transform_0, window_bounds = array<i64: 1, 8, 512>}, {transform_indices = @transform_1, window_bounds = array<i64: 1, 8, 128>}, {pipeline_mode = #tpu.pipeline_mode<synchronous>, transform_indices = @transform_2, window_bounds = array<i64: 8, 24>}, {pipeline_mode = #tpu.pipeline_mode<synchronous>, transform_indices = @transform_3, window_bounds = array<i64: 8, 1>}, {transform_indices = @transform_4, window_bounds = array<i64: 1, 8, 512>}, {transform_indices = @transform_5, window_bounds = array<i64: 1, 8, 2>}]} {
    %c0 = arith.constant 0 : index
    %c0_0 = arith.constant 0 : index
    %c0_1 = arith.constant 0 : index
    %0 = vector.load %arg2[%c0, %c0_0, %c0_1] : memref<1x8x512xf32, #tpu.memory_space<vmem>>, vector<1x8x512xf32>
    %1 = vector.shape_cast %0 : vector<1x8x512xf32> to vector<8x512xf32>
    %c0_2 = arith.constant 0 : index
    %c0_3 = arith.constant 0 : index
    %c0_4 = arith.constant 0 : index
    %2 = vector.load %arg3[%c0_2, %c0_3, %c0_4] : memref<1x8x128xf32, #tpu.memory_space<vmem>>, vector<1x8x128xf32>
    %3 = vector.shape_cast %2 : vector<1x8x128xf32> to vector<8x128xf32>
    %4 = tpu.concatenate %1, %3 in 1 : vector<8x512xf32>, vector<8x128xf32> -> vector<8x640xf32>
    %5 = vector.extract_strided_slice %4 {offsets = [0, 0], sizes = [8, 512], strides = [1, 1]} : vector<8x640xf32> to vector<8x512xf32>
    %6 = vector.extract_strided_slice %4 {offsets = [0, 1], sizes = [8, 512], strides = [1, 1]} : vector<8x640xf32> to vector<8x512xf32>
    %7 = vector.extract_strided_slice %4 {offsets = [0, 2], sizes = [8, 512], strides = [1, 1]} : vector<8x640xf32> to vector<8x512xf32>
    %8 = tpu.concatenate %5, %6, %7 in 0 : vector<8x512xf32>, vector<8x512xf32>, vector<8x512xf32> -> vector<24x512xf32>
    %c0_5 = arith.constant 0 : index
    %c0_6 = arith.constant 0 : index
    %9 = vector.load %arg4[%c0_5, %c0_6] : memref<8x24xf32, #tpu.memory_space<vmem>>, vector<8x24xf32>
    %cst = arith.constant dense<0.000000e+00> : vector<8x512xf32>
    %10 = tpu.matmul %9, %8, %cst {dimension_numbers = #tpu.dot_dimension_numbers<[1], [0], [0], [1], [0, 0, 1, 1], [], []>} : vector<8x24xf32>, vector<24x512xf32>, vector<8x512xf32> -> vector<8x512xf32>
    %c0_7 = arith.constant 0 : index
    %c0_8 = arith.constant 0 : index
    %11 = vector.load %arg5[%c0_7, %c0_8] : memref<8x1xf32, #tpu.memory_space<vmem>>, vector<8x1xf32>
    %12 = vector.broadcast %11 : vector<8x1xf32> to vector<8x512xf32>
    %13 = arith.addf %10, %12 : vector<8x512xf32>
    %c0_9 = arith.constant 0 : index
    %c0_10 = arith.constant 0 : index
    %c0_11 = arith.constant 0 : index
    %14 = vector.load %arg6[%c0_9, %c0_10, %c0_11] : memref<1x8x512xf32, #tpu.memory_space<vmem>>, vector<1x8x512xf32>
    %15 = vector.shape_cast %14 : vector<1x8x512xf32> to vector<8x512xf32>
    %16 = vector.shape_cast %13 : vector<8x512xf32> to vector<1x8x512xf32>
    tpu.vector_store %arg6[%c0_9, %c0_10, %c0_11], %16 {strides = array<i32>} : memref<1x8x512xf32, #tpu.memory_space<vmem>>, vector<1x8x512xf32>,
    %c0_i32 = arith.constant 0 : i32
    %17 = arith.cmpi eq, %arg1, %c0_i32 : i32
    %18 = arith.extui %17 : i1 to i32
    %c0_i32_12 = arith.constant 0 : i32
    %19 = arith.cmpi ne, %18, %c0_i32_12 : i32
    scf.if %19 {
      %cst_23 = arith.constant 0.000000e+00 : f32
      %42 = vector.broadcast %cst_23 : f32 to vector<1x8x2xf32>
      %c0_24 = arith.constant 0 : index
      %c0_25 = arith.constant 0 : index
      %c0_26 = arith.constant 0 : index
      %43 = vector.load %arg7[%c0_24, %c0_25, %c0_26] : memref<1x8x2xf32, #tpu.memory_space<vmem>>, vector<1x8x2xf32>
      tpu.vector_store %arg7[%c0_24, %c0_25, %c0_26], %42 {strides = array<i32>} : memref<1x8x2xf32, #tpu.memory_space<vmem>>, vector<1x8x2xf32>,
    } else {
    }
    %20 = tpu.iota {dimensions = array<i32: 1>} : vector<1x512xi32>
    %c512_i32 = arith.constant 512 : i32
    %21 = arith.muli %arg1, %c512_i32 : i32
    %22 = vector.broadcast %21 : i32 to vector<1x512xi32>
    %23 = arith.addi %22, %20 : vector<1x512xi32>
    %c512_i32_13 = arith.constant 512 : i32
    %24 = vector.broadcast %c512_i32_13 : i32 to vector<1x512xi32>
    %25 = arith.cmpi slt, %23, %24 : vector<1x512xi32>
    %cst_14 = arith.constant 0.000000e+00 : f32
    %26 = vector.shape_cast %25 : vector<1x512xi1> to vector<1x512xi1>
    %27 = vector.broadcast %26 : vector<1x512xi1> to vector<8x512xi1>
    %28 = vector.broadcast %cst_14 : f32 to vector<8x512xf32>
    %29 = arith.select %27, %13, %28 : vector<8x512xi1>, vector<8x512xf32>
    %c0_15 = arith.constant 0 : index
    %c0_16 = arith.constant 0 : index
    %c0_17 = arith.constant 0 : index
    %30 = vector.load %arg7[%c0_15, %c0_16, %c0_17] : memref<1x8x2xf32, #tpu.memory_space<vmem>>, vector<1x8x2xf32>
    %31 = vector.shape_cast %30 : vector<1x8x2xf32> to vector<8x2xf32>
    %cst_18 = arith.constant dense<0.000000e+00> : vector<8xf32>
    %32 = vector.multi_reduction <add>, %29, %cst_18 [1] : vector<8x512xf32> to vector<8xf32>
    %33 = vector.shape_cast %32 : vector<8xf32> to vector<8x1xf32>
    %34 = arith.mulf %29, %29 : vector<8x512xf32>
    %cst_19 = arith.constant dense<0.000000e+00> : vector<8xf32>
    %35 = vector.multi_reduction <add>, %34, %cst_19 [1] : vector<8x512xf32> to vector<8xf32>
    %36 = vector.shape_cast %35 : vector<8xf32> to vector<8x1xf32>
    %37 = tpu.concatenate %33, %36 in 1 : vector<8x1xf32>, vector<8x1xf32> -> vector<8x2xf32>
    %38 = arith.addf %31, %37 : vector<8x2xf32>
    %c0_20 = arith.constant 0 : index
    %c0_21 = arith.constant 0 : index
    %c0_22 = arith.constant 0 : index
    %39 = vector.load %arg7[%c0_20, %c0_21, %c0_22] : memref<1x8x2xf32, #tpu.memory_space<vmem>>, vector<1x8x2xf32>
    %40 = vector.shape_cast %39 : vector<1x8x2xf32> to vector<8x2xf32>
    %41 = vector.shape_cast %38 : vector<8x2xf32> to vector<1x8x2xf32>
    tpu.vector_store %arg7[%c0_20, %c0_21, %c0_22], %41 {strides = array<i32>} : memref<1x8x2xf32, #tpu.memory_space<vmem>>, vector<1x8x2xf32>,
    return
  }
  func.func @transform_0(%arg0: i32, %arg1: i32) -> (i32, i32, i32) {
    %c0_i32 = arith.constant 0 : i32
    %c0_i32_0 = arith.constant 0 : i32
    return %arg0, %c0_i32, %arg1 : i32, i32, i32
  }
  func.func @transform_1(%arg0: i32, %arg1: i32) -> (i32, i32, i32) {
    %c1_i32 = arith.constant 1 : i32
    %0 = arith.addi %arg1, %c1_i32 : i32
    %c4_i32 = arith.constant 4 : i32
    %1 = arith.muli %0, %c4_i32 : i32
    %c0_i32 = arith.constant 0 : i32
    %c0_i32_0 = arith.constant 0 : i32
    return %arg0, %c0_i32, %1 : i32, i32, i32
  }
  func.func @transform_2(%arg0: i32, %arg1: i32) -> (i32, i32) {
    %c0_i32 = arith.constant 0 : i32
    %c0_i32_0 = arith.constant 0 : i32
    %c0_i32_1 = arith.constant 0 : i32
    return %c0_i32, %c0_i32_0 : i32, i32
  }
  func.func @transform_3(%arg0: i32, %arg1: i32) -> (i32, i32) {
    %c0_i32 = arith.constant 0 : i32
    %c0_i32_0 = arith.constant 0 : i32
    %c0_i32_1 = arith.constant 0 : i32
    return %c0_i32, %c0_i32_0 : i32, i32
  }
  func.func @transform_4(%arg0: i32, %arg1: i32) -> (i32, i32, i32) {
    %c0_i32 = arith.constant 0 : i32
    %c0_i32_0 = arith.constant 0 : i32
    return %arg0, %c0_i32, %arg1 : i32, i32, i32
  }
  func.func @transform_5(%arg0: i32, %arg1: i32) -> (i32, i32, i32) {
    %c0_i32 = arith.constant 0 : i32
    %c0_i32_0 = arith.constant 0 : i32
    %c0_i32_1 = arith.constant 0 : i32
    return %arg0, %c0_i32, %c0_i32_0 : i32, i32, i32
  }
}

</mosaic_0001>

<llo_original>
// kernel: tpu_custom_call.1
$region0: #{tpu_custom_call.1}
  #allocation0 [shape = 'u32[]', space=smem, size = 0x4, offset = 0x4, fixed_abs, tag = 'smem constant byte address 0x4 - core index']
  #allocation1 [shape = 'u32[72,128]{1,0:T(1,128)}', space=vmem, size = 0x9000, scoped, tag = 'internal scratch']
  %s0 = inlined_call_operand.hbm [shape: f32[2,8,640], index: 0, kind: input, shape index: {}]
  %s1 = inlined_call_operand.hbm [shape: f32[2,8,640], index: 1, kind: input, shape index: {}]
  %s2 = inlined_call_operand.vmem [shape: f32[8,24], index: 2, kind: input, shape index: {}]
  %s3 = inlined_call_operand.vmem [shape: f32[8,1], index: 3, kind: input, shape index: {}]
  %s4 = inlined_call_operand.hbm [shape: f32[2,8,512], index: 4, kind: output, shape index: {0}]
  %s5 = inlined_call_operand.vmem [shape: f32[2,8,2], index: 5, kind: output, shape index: {1}]
  %6 = xla_tuple %s4, %s5
  %s7 = sld [smem:[#allocation0]]
  $region69: #{tpu_custom_call.1} parent=0
    _
  %s9 = ssub.s32 1, %s7
  %s10 = scalar_select 0, %s9, %s7
  $region1: #{tpu_custom_call.1} parent=0
    #allocation2 [shape = 'u8[32768]{0}', space=vmem, size = 0x8000, scoped, tag = 'input window, operand 0']
    #allocation3 [shape = 's32[2]{0}', space=sflag, size = 0x8, scoped, tag = 'scoped memory for tpu_custom_call.1']
    #allocation4 [shape = 's32[2]{0}', space=sflag, size = 0x8, scoped, tag = 'scoped memory for tpu_custom_call.1']
    #allocation5 [shape = 'u8[8192]{0}', space=vmem, size = 0x2000, scoped, tag = 'input window, operand 1']
    #allocation6 [shape = 's32[2]{0}', space=sflag, size = 0x8, scoped, tag = 'scoped memory for tpu_custom_call.1']
    #allocation7 [shape = 'u8[32768]{0}', space=vmem, size = 0x8000, scoped, tag = 'output window, operand 0']
    %11 = vsyncpa [#allocation3], 0
    %s12 = scalar_lea.sflag [#allocation3], 1
    %13 = vsyncpa %s12, 0
    %14 = vsyncpa [#allocation6], 0
    %s15 = scalar_lea.sflag [#allocation6], 1
    %16 = vsyncpa %s15, 0
    %17 = vsyncpa [#allocation4], 0
    %s18 = scalar_lea.sflag [#allocation4], 1
    %19 = vsyncpa %s18, 0
    loop: start=0, step=1, limit=4
    $region2: #{tpu_custom_call.1} parent=1 // loop_pre_header
      _
    $region3: #{tpu_custom_call.1} parent=1 // loop_header
      %s21 = sphi 0, %s25
      %p22 = scmp.ge.s32.totalorder %s21, 4
      %s28 = sphi 0, %s40
      %s29 = sphi 0, %s36
      %s30 = sphi 0, %s28
      %s31 = sphi 0, %s29
      %s32 = sphi 0, %s30
      %s33 = sphi 0, %s31
      %s45 = sphi 0, %s47
      %s48 = sphi 0, %s45
      %s49 = sphi 0, %s48
      %s65 = sphi 0, %s49
      %s77 = sphi 0, %s79
      %s80 = sphi 0, %s77
      %s81 = sphi 0, %s80
      %s97 = sphi 0, %s81
      %s101 = sphi 0, %s101
      %s103 = sphi 0, %s101
      %s104 = sphi 0, %s103
      %s118 = sphi 0, %s104
      %s122 = sphi 0, %s122
      %s124 = sphi 0, %s122
      %s125 = sphi 0, %s124
      %s139 = sphi 0, %s125
      %s147 = sphi 0, %s149
      %s150 = sphi 0, %s147
      %s151 = sphi 0, %s150
      %s167 = sphi 0, %s151
      %s173 = sphi 0, %s175
      %s176 = sphi 0, %s173
      %s177 = sphi 0, %s176
      %s193 = sphi 0, %s177
    $region4: #{tpu_custom_call.1} parent=1 // loop_header_branch
      %24 = sbr.rel (%p22) target = $region8
    $region5: #{tpu_custom_call.1} parent=1 // loop_body
      %s26 = ssub.s32 %s21, 1
      %s27 = ssub.s32 %s21, 2
      %s34 = sadd.s32 1, %s29
      %p35 = scmp.ge.s32.totalorder %s34, 1
      %s36 = scalar_select %p35, 0, %s34
      %s37 = sadd.s32 1, %s28
      %s38 = scalar_select %p35, %s37, %s28
      %p39 = scmp.ge.s32.totalorder %s38, 2
      %s40 = scalar_select %p39, 0, %s38
      %s41 = ssub.s32 %s28, %s40
      %s42 = ssub.s32 %s29, %s36
      %s43 = sor.u32 %s41, %s42
      %p44 = scmp.eq.s32.totalorder %s43, 0
      %s46 = sadd.s32 %s45, 1
      %s47 = scalar_select %p44, %s45, %s46
      %p50 = pneg %p44
      %p51 = scmp.eq.s32.totalorder %s21, 1
      %p52 = por %p50, %p51
      %p53 = scmp.ne.s32.totalorder %s45, %s48
      %p54 = scmp.eq.s32.totalorder %s21, 0
      %p55 = por %p53, %p54
      %p56 = scmp.ne.s32.totalorder %s45, %s48
      %p57 = scmp.eq.s32.totalorder %s26, 1
      %p58 = por %p56, %p57
      %p59 = scmp.ne.s32.totalorder %s48, %s49
      %p60 = scmp.eq.s32.totalorder %s26, 0
      %p61 = por %p59, %p60
      %p62 = scmp.ne.s32.totalorder %s48, %s49
      %p63 = scmp.eq.s32.totalorder %s27, 1
      %p64 = por %p62, %p63
      %p66 = scmp.ne.s32.totalorder %s49, %s65
      %p67 = scmp.eq.s32.totalorder %s27, 0
      %p68 = por %p66, %p67
      %s69 = sadd.s32 %s29, 1
      %s70 = smul.u32 %s69, 4
      %s71 = sadd.s32 %s36, 1
      %s72 = smul.u32 %s71, 4
      %s73 = ssub.s32 %s28, %s40
      %s74 = ssub.s32 %s70, %s72
      %s75 = sor.u32 %s73, %s74
      %p76 = scmp.eq.s32.totalorder %s75, 0
      %s78 = sadd.s32 %s77, 1
      %s79 = scalar_select %p76, %s77, %s78
      %p82 = pneg %p76
      %p83 = scmp.eq.s32.totalorder %s21, 1
      %p84 = por %p82, %p83
      %p85 = scmp.ne.s32.totalorder %s77, %s80
      %p86 = scmp.eq.s32.totalorder %s21, 0
      %p87 = por %p85, %p86
      %p88 = scmp.ne.s32.totalorder %s77, %s80
      %p89 = scmp.eq.s32.totalorder %s26, 1
      %p90 = por %p88, %p89
      %p91 = scmp.ne.s32.totalorder %s80, %s81
      %p92 = scmp.eq.s32.totalorder %s26, 0
      %p93 = por %p91, %p92
      %p94 = scmp.ne.s32.totalorder %s80, %s81
      %p95 = scmp.eq.s32.totalorder %s27, 1
      %p96 = por %p94, %p95
      %p98 = scmp.ne.s32.totalorder %s81, %s97
      %p99 = scmp.eq.s32.totalorder %s27, 0
      %p100 = por %p98, %p99
      %s102 = sadd.s32 %s101, 1
      %p105 = scmp.eq.s32.totalorder %s21, 1
      %p106 = scmp.ne.s32.totalorder %s101, %s103
      %p107 = scmp.eq.s32.totalorder %s21, 0
      %p108 = por %p106, %p107
      %p109 = scmp.ne.s32.totalorder %s101, %s103
      %p110 = scmp.eq.s32.totalorder %s26, 1
      %p111 = por %p109, %p110
      %p112 = scmp.ne.s32.totalorder %s103, %s104
      %p113 = scmp.eq.s32.totalorder %s26, 0
      %p114 = por %p112, %p113
      %p115 = scmp.ne.s32.totalorder %s103, %s104
      %p116 = scmp.eq.s32.totalorder %s27, 1
      %p117 = por %p115, %p116
      %p119 = scmp.ne.s32.totalorder %s104, %s118
      %p120 = scmp.eq.s32.totalorder %s27, 0
      %p121 = por %p119, %p120
      %s123 = sadd.s32 %s122, 1
      %p126 = scmp.eq.s32.totalorder %s21, 1
      %p127 = scmp.ne.s32.totalorder %s122, %s124
      %p128 = scmp.eq.s32.totalorder %s21, 0
      %p129 = por %p127, %p128
      %p130 = scmp.ne.s32.totalorder %s122, %s124
      %p131 = scmp.eq.s32.totalorder %s26, 1
      %p132 = por %p130, %p131
      %p133 = scmp.ne.s32.totalorder %s124, %s125
      %p134 = scmp.eq.s32.totalorder %s26, 0
      %p135 = por %p133, %p134
      %p136 = scmp.ne.s32.totalorder %s124, %s125
      %p137 = scmp.eq.s32.totalorder %s27, 1
      %p138 = por %p136, %p137
      %p140 = scmp.ne.s32.totalorder %s125, %s139
      %p141 = scmp.eq.s32.totalorder %s27, 0
      %p142 = por %p140, %p141
      %s143 = ssub.s32 %s28, %s40
      %s144 = ssub.s32 %s29, %s36
      %s145 = sor.u32 %s143, %s144
      %p146 = scmp.eq.s32.totalorder %s145, 0
      %s148 = sadd.s32 %s147, 1
      %s149 = scalar_select %p146, %s147, %s148
      %p152 = pneg %p146
      %p153 = scmp.eq.s32.totalorder %s21, 1
      %p154 = por %p152, %p153
      %p155 = scmp.ne.s32.totalorder %s147, %s150
      %p156 = scmp.eq.s32.totalorder %s21, 0
      %p157 = por %p155, %p156
      %p158 = scmp.ne.s32.totalorder %s147, %s150
      %p159 = scmp.eq.s32.totalorder %s26, 1
      %p160 = por %p158, %p159
      %p161 = scmp.ne.s32.totalorder %s150, %s151
      %p162 = scmp.eq.s32.totalorder %s26, 0
      %p163 = por %p161, %p162
      %p164 = scmp.ne.s32.totalorder %s150, %s151
      %p165 = scmp.eq.s32.totalorder %s27, 1
      %p166 = por %p164, %p165
      %p168 = scmp.ne.s32.totalorder %s151, %s167
      %p169 = scmp.eq.s32.totalorder %s27, 0
      %p170 = por %p168, %p169
      %s171 = ssub.s32 %s28, %s40
      %p172 = scmp.eq.s32.totalorder %s171, 0
      %s174 = sadd.s32 %s173, 1
      %s175 = scalar_select %p172, %s173, %s174
      %p178 = pneg %p172
      %p179 = scmp.eq.s32.totalorder %s21, 1
      %p180 = por %p178, %p179
      %p181 = scmp.ne.s32.totalorder %s173, %s176
      %p182 = scmp.eq.s32.totalorder %s21, 0
      %p183 = por %p181, %p182
      %p184 = scmp.ne.s32.totalorder %s173, %s176
      %p185 = scmp.eq.s32.totalorder %s26, 1
      %p186 = por %p184, %p185
      %p187 = scmp.ne.s32.totalorder %s176, %s177
      %p188 = scmp.eq.s32.totalorder %s26, 0
      %p189 = por %p187, %p188
      %p190 = scmp.ne.s32.totalorder %s176, %s177
      %p191 = scmp.eq.s32.totalorder %s27, 1
      %p192 = por %p190, %p191
      %p194 = scmp.ne.s32.totalorder %s177, %s193
      %p195 = scmp.eq.s32.totalorder %s27, 0
      %p196 = por %p194, %p195
      %p197 = scmp.le.s32.totalorder 1, %s21
      %p198 = scmp.lt.s32.totalorder %s21, 3
      %p199 = pnand %p197, %p198
      %p200 = pneg %p199
      // Predicated region
      $region9: #{tpu_custom_call.1} parent=5 // pred_check
        _
      $region10: #{tpu_custom_call.1} parent=5 // pred_check_branch
        %202 = sbr.rel (%p199) target = $region12
      $region11: #{tpu_custom_call.1} parent=5 // pred_region
        %s203 = ssub.s32 %s21, 1
        // Predicated region
        $region13: #{tpu_custom_call.1} parent=11 // pred_check
          %p204 = pneg %p114
        $region14: #{tpu_custom_call.1} parent=11 // pred_check_branch
          %206 = sbr.rel (%p204) target = $region16
        $region15: #{tpu_custom_call.1} parent=11 // pred_region
          _
        $region16: #{tpu_custom_call.1} parent=11 // pred_fallthru
          _
        // Predicated region
        $region17: #{tpu_custom_call.1} parent=11 // pred_check
          %p207 = pneg %p135
        $region18: #{tpu_custom_call.1} parent=11 // pred_check_branch
          %209 = sbr.rel (%p207) target = $region20
        $region19: #{tpu_custom_call.1} parent=11 // pred_region
          _
        $region20: #{tpu_custom_call.1} parent=11 // pred_fallthru
          _
      $region12: #{tpu_custom_call.1} parent=5 // pred_fallthru
        _
      %p210 = scmp.lt.s32.totalorder %s21, 2
      // Predicated region
      $region21: #{tpu_custom_call.1} parent=5 // pred_check
        %p211 = pneg %p210
      $region22: #{tpu_custom_call.1} parent=5 // pred_check_branch
        %213 = sbr.rel (%p211) target = $region24
      $region23: #{tpu_custom_call.1} parent=5 // pred_region
        // Predicated region
        $region25: #{tpu_custom_call.1} parent=23 // pred_check
          %p214 = pneg %p55
        $region26: #{tpu_custom_call.1} parent=23 // pred_check_branch
          %216 = sbr.rel (%p214) target = $region28
        $region27: #{tpu_custom_call.1} parent=23 // pred_region
          %s217 = sand.u32 %s45, 1
          %s218 = scalar_lea.sflag [#allocation3], %s217
          %s219 = sand.u32 %s45, 1
          %s220 = smul.addr %s219, 32
          %s221 = scalar_lea.vmem [#allocation2], %s220
          %s222 = smul.u32 4, %s29
          %s223 = ssub.s32 5, %s222
          %p224 = scmp.lt.s32.totalorder %s223, 4
          %s225 = scalar_select %p224, %s223, 4
          %s226 = smul.u32 8, %s225
          %s227 = ssub.s32 32, %s226
          %s228 = sshll.u32 %s227, 4
          %229 = vsyncadd %s218, %s228
          %p230 = scmp.ne.s32.totalorder 0, %s226
          %s231 = smul.addr %s28, 5
          %s232 = sadd.s32 %s222, %s231
          %s233 = smul.addr %s232, 8
          %s234 = scalar_lea.hbm %s0, %s233
          %s235 = smul.u32 %s225, 8
          %s236 = sshll.u32 %s235, 4
          %s237 = sshll.u32 %s234, 4
          %s238 = int_to_ptr.hbm [resolvable:$true] %s237
          %s239 = sshll.u32 %s221, 4
          %s240 = int_to_ptr.vmem [resolvable:$true] %s239
          %242 = dma.hbm_to_vmem [thread:$0]  (%p230), %s238, %s236, %s240, %s218
        $region28: #{tpu_custom_call.1} parent=23 // pred_fallthru
          _
        // Predicated region
        $region29: #{tpu_custom_call.1} parent=23 // pred_check
          %p243 = pneg %p87
        $region30: #{tpu_custom_call.1} parent=23 // pred_check_branch
          %245 = sbr.rel (%p243) target = $region32
        $region31: #{tpu_custom_call.1} parent=23 // pred_region
          %s246 = sand.u32 %s77, 1
          %s247 = scalar_lea.sflag [#allocation6], %s246
          %s248 = sand.u32 %s77, 1
          %s249 = smul.addr %s248, 8
          %s250 = scalar_lea.vmem [#allocation5], %s249
          %s251 = sadd.s32 %s29, 1
          %s252 = smul.u32 %s251, 4
          %254 = vsyncadd %s247, 0
          %s255 = smul.addr %s28, 5
          %s256 = sadd.s32 %s252, %s255
          %s257 = smul.addr %s256, 8
          %s258 = scalar_lea.hbm %s1, %s257
          %s260 = sshll.u32 %s258, 4
          %s261 = int_to_ptr.hbm [resolvable:$true] %s260
          %s262 = sshll.u32 %s250, 4
          %s263 = int_to_ptr.vmem [resolvable:$true] %s262
          %265 = dma.hbm_to_vmem [thread:$0]  %s261, 128, %s263, %s247
        $region32: #{tpu_custom_call.1} parent=23 // pred_fallthru
          _
      $region24: #{tpu_custom_call.1} parent=5 // pred_fallthru
        _
      %p266 = scmp.le.s32.totalorder 1, %s21
      %p267 = scmp.lt.s32.totalorder %s21, 3
      %p268 = pnand %p266, %p267
      %p269 = pneg %p268
      // Predicated region
      $region33: #{tpu_custom_call.1} parent=5 // pred_check
        _
      $region34: #{tpu_custom_call.1} parent=5 // pred_check_branch
        %271 = sbr.rel (%p268) target = $region36
      $region35: #{tpu_custom_call.1} parent=5 // pred_region
        %s272 = ssub.s32 %s21, 1
        %s273 = sand.u32 %s48, 1
        %s274 = scalar_lea.sflag [#allocation3], %s273
        %s275 = sand.u32 %s48, 1
        %s276 = smul.addr %s275, 32
        %s277 = scalar_lea.vmem [#allocation2], %s276
        // Predicated region
        $region37: #{tpu_custom_call.1} parent=35 // pred_check
          %p278 = pneg %p61
        $region38: #{tpu_custom_call.1} parent=35 // pred_check_branch
          %280 = sbr.rel (%p278) target = $region40
        $region39: #{tpu_custom_call.1} parent=35 // pred_region
          %282 = dma.done %s274, 512
        $region40: #{tpu_custom_call.1} parent=35 // pred_fallthru
          _
        %s283 = sand.u32 %s80, 1
        %s284 = scalar_lea.sflag [#allocation6], %s283
        %s285 = sand.u32 %s80, 1
        %s286 = smul.addr %s285, 8
        %s287 = scalar_lea.vmem [#allocation5], %s286
        // Predicated region
        $region41: #{tpu_custom_call.1} parent=35 // pred_check
          %p288 = pneg %p93
        $region42: #{tpu_custom_call.1} parent=35 // pred_check_branch
          %290 = sbr.rel (%p288) target = $region44
        $region43: #{tpu_custom_call.1} parent=35 // pred_region
          %292 = dma.done %s284, 128
        $region44: #{tpu_custom_call.1} parent=35 // pred_fallthru
          _
        %s293 = sand.u32 %s48, 1
        %s294 = scalar_lea.sflag [#allocation3], %s293
        %s295 = sand.u32 %s48, 1
        %s296 = smul.addr %s295, 32
        %s297 = scalar_lea.vmem [#allocation2], %s296
        %p298 = pneg %p61
        %p299 = pneg %p58
        %s300 = sand.u32 %s80, 1
        %s301 = scalar_lea.sflag [#allocation6], %s300
        %s302 = sand.u32 %s80, 1
        %s303 = smul.addr %s302, 8
        %s304 = scalar_lea.vmem [#allocation5], %s303
        %p305 = pneg %p93
        %p306 = pneg %p90
        %p307 = pneg %p114
        %p308 = pneg %p111
        %p309 = pneg %p135
        %p310 = pneg %p132
        %p311 = pneg %p163
        %p312 = pneg %p160
        %s313 = sand.u32 %s150, 1
        %s314 = scalar_lea.sflag [#allocation4], %s313
        %s315 = sand.u32 %s150, 1
        %s316 = smul.addr %s315, 32
        %s317 = scalar_lea.vmem [#allocation7], %s316
        %p318 = pneg %p189
        %p319 = pneg %p186
        %p320 = scmp.lt.s32.totalorder %s30, 1
        %s321 = scalar_select %p320, %s30, 1
        %s322 = smul.addr %s321, 8
        %s323 = scalar_lea.vmem %s5, %s322
        %s324 = smul.u32 4, %s31
        %s325 = ssub.s32 5, %s324
        %p326 = scmp.lt.s32.totalorder %s325, 4
        %s327 = scalar_select %p326, %s325, 4
        %s328 = smul.u32 8, %s327
        %s329 = sadd.s32 %s31, 1
        %s330 = smul.u32 %s329, 4
        %s331 = smul.u32 4, %s31
        %p332 = scmp.lt.s32.totalorder %s30, 1
        %s333 = scalar_select %p332, %s30, 1
        %s334 = smul.addr %s333, 8
        %s335 = scalar_lea.vmem %s5, %s334
        %v336 = vld [vmem:[%s277] sm:$0xff]
        %v337 = vld [vmem:[%s277 + $0x8] sm:$0xff]
        %v338 = vld [vmem:[%s277 + $0x10] sm:$0xff]
        %v339 = vld [vmem:[%s277 + $0x18] sm:$0xff]
        %v340 = vld [vmem:[%s287] sm:$0xff]
        %346 = vrot.lane.b32.xlu0 %v336, 127
        %v347 = vpop.permute.xlu0 %346
        %348 = vrot.lane.b32.xlu0 %v337, 127
        %v349 = vpop.permute.xlu0 %348
        %350 = vrot.lane.b32.xlu0 %v338, 127
        %v351 = vpop.permute.xlu0 %350
        %352 = vrot.lane.b32.xlu0 %v339, 127
        %v353 = vpop.permute.xlu0 %352
        %354 = vrot.lane.b32.xlu0 %v340, 127
        %v355 = vpop.permute.xlu0 %354
        %vm356 = vcmask 1039360
        %v357 = vsel %vm356, %v347, %v349
        %v358 = vsel %vm356, %v349, %v351
        %v359 = vsel %vm356, %v351, %v353
        %v360 = vsel %vm356, %v353, %v355
        %365 = vrot.lane.b32.xlu0 %v336, 126
        %v366 = vpop.permute.xlu0 %365
        %367 = vrot.lane.b32.xlu0 %v337, 126
        %v368 = vpop.permute.xlu0 %367
        %369 = vrot.lane.b32.xlu0 %v338, 126
        %v370 = vpop.permute.xlu0 %369
        %371 = vrot.lane.b32.xlu0 %v339, 126
        %v372 = vpop.permute.xlu0 %371
        %373 = vrot.lane.b32.xlu0 %v340, 126
        %v374 = vpop.permute.xlu0 %373
        %vm375 = vcmask 1031168
        %v376 = vsel %vm375, %v366, %v368
        %v377 = vsel %vm375, %v368, %v370
        %v378 = vsel %vm375, %v370, %v372
        %v379 = vsel %vm375, %v372, %v374
        %v384 = vld [vmem:[%s2] sm:$0xff]
        %v385 = vld [vmem:[%s3] sm:$0xff]
        %387 = vset.pattern.permute.xlu0 0
        %388 = vperm.xlu0 %387, %v385
        %v389 = vpop.permute.xlu0 %388
        %vm391 = vcmask 195584
        %v393 = vsel %vm391, %v384, 0
        %395 = vmatpush.msra.mxu0 0.0
        %396 = vmatpush.msra.mxu0 0.0
        %397 = vmatpush.msra.mxu0 0.0
        %398 = vmatpush.msra.mxu0 0.0
        %399 = vmatpush.msra.mxu0 0.0
        %400 = vmatpush.msra.mxu0 0.0
        %401 = vmatpush.msra.mxu0 0.0
        %402 = vmatpush.msra.mxu0 0.0
        %403 = vmatpush.msra.mxu0 0.0
        %404 = vmatpush.msra.mxu0 0.0
        %405 = vmatpush.msra.mxu0 0.0
        %406 = vmatpush.msra.mxu0 0.0
        %407 = vmatpush.msra.mxu0 0.0
        %408 = vmatpush.msra.mxu0 %v376
        %409 = vmatpush.msra.mxu0 %v357
        %410 = vmatpush.msra.mxu0 %v336
        %411 = vmatmul.f32.gmra.mxu0 %v393
        %v412 = vpop.f32.mrf.mxu0
        %v413 = vadd.f32 %v389, %v412
        %414 = vdwg.mxu0
        %415 = vmatpush.msra.mxu0 0.0
        %416 = vmatpush.msra.mxu0 0.0
        %417 = vmatpush.msra.mxu0 0.0
        %418 = vmatpush.msra.mxu0 0.0
        %419 = vmatpush.msra.mxu0 0.0
        %420 = vmatpush.msra.mxu0 0.0
        %421 = vmatpush.msra.mxu0 0.0
        %422 = vmatpush.msra.mxu0 0.0
        %423 = vmatpush.msra.mxu0 0.0
        %424 = vmatpush.msra.mxu0 0.0
        %425 = vmatpush.msra.mxu0 0.0
        %426 = vmatpush.msra.mxu0 0.0
        %427 = vmatpush.msra.mxu0 0.0
        %428 = vmatpush.msra.mxu0 %v377
        %429 = vmatpush.msra.mxu0 %v358
        %430 = vmatpush.msra.mxu0 %v337
        %431 = vmatmul.f32.gmra.mxu0 %v393
        %v432 = vpop.f32.mrf.mxu0
        %v433 = vadd.f32 %v389, %v432
        %434 = vdwg.mxu0
        %435 = vmatpush.msra.mxu0 0.0
        %436 = vmatpush.msra.mxu0 0.0
        %437 = vmatpush.msra.mxu0 0.0
        %438 = vmatpush.msra.mxu0 0.0
        %439 = vmatpush.msra.mxu0 0.0
        %440 = vmatpush.msra.mxu0 0.0
        %441 = vmatpush.msra.mxu0 0.0
        %442 = vmatpush.msra.mxu0 0.0
        %443 = vmatpush.msra.mxu0 0.0
        %444 = vmatpush.msra.mxu0 0.0
        %445 = vmatpush.msra.mxu0 0.0
        %446 = vmatpush.msra.mxu0 0.0
        %447 = vmatpush.msra.mxu0 0.0
        %448 = vmatpush.msra.mxu0 %v378
        %449 = vmatpush.msra.mxu0 %v359
        %450 = vmatpush.msra.mxu0 %v338
        %451 = vmatmul.f32.gmra.mxu0 %v393
        %v452 = vpop.f32.mrf.mxu0
        %v453 = vadd.f32 %v389, %v452
        %454 = vdwg.mxu0
        %455 = vmatpush.msra.mxu0 0.0
        %456 = vmatpush.msra.mxu0 0.0
        %457 = vmatpush.msra.mxu0 0.0
        %458 = vmatpush.msra.mxu0 0.0
        %459 = vmatpush.msra.mxu0 0.0
        %460 = vmatpush.msra.mxu0 0.0
        %461 = vmatpush.msra.mxu0 0.0
        %462 = vmatpush.msra.mxu0 0.0
        %463 = vmatpush.msra.mxu0 0.0
        %464 = vmatpush.msra.mxu0 0.0
        %465 = vmatpush.msra.mxu0 0.0
        %466 = vmatpush.msra.mxu0 0.0
        %467 = vmatpush.msra.mxu0 0.0
        %468 = vmatpush.msra.mxu0 %v379
        %469 = vmatpush.msra.mxu0 %v360
        %470 = vmatpush.msra.mxu0 %v339
        %471 = vmatmul.f32.gmra.mxu0 %v393
        %v472 = vpop.f32.mrf.mxu0
        %v473 = vadd.f32 %v389, %v472
        %474 = vdwg.mxu0
        %475 = vst [vmem:[%s317] sm:$0xff] %v413
        %476 = vst [vmem:[%s317 + $0x8] sm:$0xff] %v433
        %477 = vst [vmem:[%s317 + $0x10] sm:$0xff] %v453
        %478 = vst [vmem:[%s317 + $0x18] sm:$0xff] %v473
        %p479 = scmp.eq.s32.totalorder %s31, 0
        // Predicated region
        $region45: #{tpu_custom_call.1} parent=35 // pred_check
          %p480 = pneg %p479
        $region46: #{tpu_custom_call.1} parent=35 // pred_check_branch
          %482 = sbr.rel (%p480) target = $region48
        $region47: #{tpu_custom_call.1} parent=35 // pred_region
          %vm483 = vcmask 15360
          %484 = vst.msk [vmem:[%s335] sm:$0xff] %vm483, 0.0
        $region48: #{tpu_custom_call.1} parent=35 // pred_fallthru
          _
        %v485 = vlaneseq
        %v486 = vand.u32 %v485, 127
        %v487 = vadd.s32 %v486, 128
        %v488 = vadd.s32 %v486, 256
        %v489 = vadd.s32 %v486, 384
        %s490 = smul.u32 %s31, 512
        %v491 = vstv %s490
        %v492 = vadd.s32 %v491, %v486
        %v493 = vadd.s32 %v491, %v487
        %v494 = vadd.s32 %v491, %v488
        %v495 = vadd.s32 %v491, %v489
        %vm496 = vcmp.lt.s32.totalorder %v492, 512
        %vm497 = vcmp.lt.s32.totalorder %v493, 512
        %vm498 = vcmp.lt.s32.totalorder %v494, 512
        %vm499 = vcmp.lt.s32.totalorder %v495, 512
        %v500 = vsel %vm496, 1, 0
        %v501 = vsel %vm497, 1, 0
        %v502 = vsel %vm498, 1, 0
        %v503 = vsel %vm499, 1, 0
        %vm504 = vcmp.eq.s32.totalorder %v500, 1
        %vm505 = vcmp.eq.s32.totalorder %v501, 1
        %vm506 = vcmp.eq.s32.totalorder %v502, 1
        %vm507 = vcmp.eq.s32.totalorder %v503, 1
        %v508 = vsel %vm504, %v413, 0.0
        %v509 = vsel %vm505, %v433, 0.0
        %v510 = vsel %vm506, %v453, 0.0
        %v511 = vsel %vm507, %v473, 0.0
        %v512 = vld [vmem:[%s335] sm:$0xff]
        %v513 = vadd.f32 %v508, %v509
        %v514 = vadd.f32 %v513, %v510
        %v515 = vadd.f32 %v514, %v511
        %516 = vadd.xlane.f32.xlu0 %v515
        %v517 = vpop.xlane.xlu0 %516
        %v518 = vmul.f32 %v508, %v508
        %v519 = vmul.f32 %v509, %v509
        %v520 = vmul.f32 %v510, %v510
        %v521 = vmul.f32 %v511, %v511
        %v522 = vadd.f32 %v518, %v519
        %v523 = vadd.f32 %v522, %v520
        %v524 = vadd.f32 %v523, %v521
        %525 = vadd.xlane.f32.xlu0 %v524
        %v526 = vpop.xlane.xlu0 %525
        %vm527 = vcmask 7168
        %v528 = vsel %vm527, %v517, %v526
        %v529 = vadd.f32 %v512, %v528
        %vm530 = vcmask 15360
        %531 = vst.msk [vmem:[%s335] sm:$0xff] %vm530, %v529
        %s532 = sand.u32 %s150, 1
        %s533 = scalar_lea.sflag [#allocation4], %s532
        %s534 = sand.u32 %s150, 1
        %s535 = smul.addr %s534, 32
        %s536 = scalar_lea.vmem [#allocation7], %s535
        %p537 = scmp.lt.s32.totalorder %s30, 1
        %s538 = scalar_select %p537, %s30, 1
        %s539 = smul.addr %s538, 8
        %s540 = scalar_lea.vmem %s5, %s539
        // Predicated region
        $region49: #{tpu_custom_call.1} parent=35 // pred_check
          %p541 = pneg %p160
        $region50: #{tpu_custom_call.1} parent=35 // pred_check_branch
          %543 = sbr.rel (%p541) target = $region52
        $region51: #{tpu_custom_call.1} parent=35 // pred_region
          %s544 = smul.u32 4, %s31
          %546 = vsyncadd %s533, 0
          %s547 = smul.addr %s30, 4
          %s548 = sadd.s32 %s544, %s547
          %s549 = smul.addr %s548, 8
          %s550 = scalar_lea.hbm %s4, %s549
          %s552 = sshll.u32 %s536, 4
          %s553 = int_to_ptr.vmem [resolvable:$true] %s552
          %s554 = sshll.u32 %s550, 4
          %s555 = int_to_ptr.hbm [resolvable:$true] %s554
          %557 = dma.vmem_to_hbm [thread:$0]  %s553, 512, %s555, %s533
        $region52: #{tpu_custom_call.1} parent=35 // pred_fallthru
          _
        // Predicated region
        $region53: #{tpu_custom_call.1} parent=35 // pred_check
          %p558 = pneg %p186
        $region54: #{tpu_custom_call.1} parent=35 // pred_check_branch
          %560 = sbr.rel (%p558) target = $region56
        $region55: #{tpu_custom_call.1} parent=35 // pred_region
          _
        $region56: #{tpu_custom_call.1} parent=35 // pred_fallthru
          _
      $region36: #{tpu_custom_call.1} parent=5 // pred_fallthru
        _
      %p561 = scmp.le.s32.totalorder 2, %s21
      // Predicated region
      $region57: #{tpu_custom_call.1} parent=5 // pred_check
        %p562 = pneg %p561
      $region58: #{tpu_custom_call.1} parent=5 // pred_check_branch
        %564 = sbr.rel (%p562) target = $region60
      $region59: #{tpu_custom_call.1} parent=5 // pred_region
        %s565 = ssub.s32 %s21, 2
        // Predicated region
        $region61: #{tpu_custom_call.1} parent=59 // pred_check
          %p566 = pneg %p166
        $region62: #{tpu_custom_call.1} parent=59 // pred_check_branch
          %568 = sbr.rel (%p566) target = $region64
        $region63: #{tpu_custom_call.1} parent=59 // pred_region
          %s569 = sand.u32 %s151, 1
          %s570 = scalar_lea.sflag [#allocation4], %s569
          %s571 = sand.u32 %s151, 1
          %s572 = smul.addr %s571, 32
          %s573 = scalar_lea.vmem [#allocation7], %s572
          %575 = dma.done %s570, 512
        $region64: #{tpu_custom_call.1} parent=59 // pred_fallthru
          _
        // Predicated region
        $region65: #{tpu_custom_call.1} parent=59 // pred_check
          %p576 = pneg %p192
        $region66: #{tpu_custom_call.1} parent=59 // pred_check_branch
          %578 = sbr.rel (%p576) target = $region68
        $region67: #{tpu_custom_call.1} parent=59 // pred_region
          %p579 = scmp.lt.s32.totalorder %s32, 1
          %s580 = scalar_select %p579, %s32, 1
          %s581 = smul.addr %s580, 8
          %s582 = scalar_lea.vmem %s5, %s581
        $region68: #{tpu_custom_call.1} parent=59 // pred_fallthru
          _
      $region60: #{tpu_custom_call.1} parent=5 // pred_fallthru
        _
    $region6: #{tpu_custom_call.1} parent=1 // loop_footer
      %s25 = sadd.s32 1, %s21
    $region7: #{tpu_custom_call.1} parent=1 // loop_footer_branch
      %20 = sbr.rel target = $region3
    $region8: #{tpu_custom_call.1} parent=1 // loop_exit
      _
    %583 = vsyncpa [#allocation3], 1
    %s584 = scalar_lea.sflag [#allocation3], 1
    %585 = vsyncpa %s584, 1
    %586 = vsyncpa [#allocation6], 1
    %s587 = scalar_lea.sflag [#allocation6], 1
    %588 = vsyncpa %s587, 1
    %589 = vsyncpa [#allocation4], 1
    %s590 = scalar_lea.sflag [#allocation4], 1
    %591 = vsyncpa %s590, 1

</llo_original>
